<compile_context>
chip_gen: v6e
topology: v6e:2x2x1
jax: 0.10.0
libtpu: 0.0.40
codegen_flags: <defaults>
</compile_context>

<pallas_src>
import functools
import math

import jax
import jax.numpy as jnp
from jax.experimental import pallas as pl
from jax.experimental.pallas import tpu as pltpu

# ---- synthetic "bert-large-uncased" stand-in config (small shapes) ----
VOCAB = 64
MAX_POS = 16
HIDDEN = 32
NUM_HEADS = 4
HEAD_DIM = HIDDEN // NUM_HEADS
FFN = 64
NUM_LAYERS = 2
LN_EPS = 1e-12
NEG_INF = -1e9


# --------------------------------------------------------------------------
# In-kernel helpers
# --------------------------------------------------------------------------
def _layernorm(y, g, b, eps):
    # f32 elementwise math; rsqrt goes to the EUP slot.
    mu = jnp.mean(y, axis=-1, keepdims=True)
    var = jnp.mean(jnp.square(y - mu), axis=-1, keepdims=True)
    return (y - mu) * jax.lax.rsqrt(var + eps) * g + b


# --------------------------------------------------------------------------
# Kernels
# --------------------------------------------------------------------------
def _embed_kernel(ids_ref, w_ref, p_ref, t_ref, g_ref, b_ref, o_ref, *,
                  vocab, b_tile, seq, eps):
    """b_tile batch rows (b_tile*S tokens) per grid step: embeddings + LN."""
    ids = ids_ref[...]                                        # (M, 1) int32
    m = ids.shape[0]
    h = w_ref.shape[1]

    # Word embedding gather as a bf16 one-hot MXU matmul (tiny synthetic vocab).
    # TODO(synk): DMA row-gather for the real 30522-row vocab (see header).
    word_oh = (jax.lax.broadcasted_iota(jnp.int32, (m, vocab), 1) == ids
               ).astype(jnp.bfloat16)                         # (M, V) bf16
    word = jnp.dot(word_oh, w_ref[...], preferred_element_type=jnp.float32)

    # Position embedding: direct table rows 0..S-1 repeated per batch row in
    # the block -- the identity one-hot matmul is gone.
    pos = jnp.broadcast_to(p_ref[...][None], (b_tile, seq, h)).reshape(m, h)

    x = word + pos + t_ref[...]                               # token_type_id = 0
    o_ref[...] = _layernorm(x, g_ref[...], b_ref[...], eps)


def _encoder_layer_kernel(x_ref, ids_ref,
                          wq_ref, wk_ref, wv_ref, bq_ref, bk_ref, bv_ref,
                          wo_ref, bo_ref, ln1_g_ref, ln1_b_ref,
                          w1_ref, b1_ref, w2_ref, b2_ref,
                          ln2_g_ref, ln2_b_ref, o_ref, *,
                          b_tile, seq, num_heads, head_dim, eps):
    """Whole encoder layer for b_tile batch rows (M = b_tile*S, H) per step."""
    hidden = num_heads * head_dim
    m = b_tile * seq
    g = b_tile * num_heads                                    # fused (batch, head)

    x = x_ref[...]                                            # (M, H) f32
    x_bf = x.astype(jnp.bfloat16)

    # Activations / head-leading weights broadcast to a single leading
    # (batch*head) axis so every attention contraction is a leading-batch 3-D
    # einsum: no per-head lane slices, no transposes, no partial stores.
    x_g = jnp.broadcast_to(x_bf.reshape(b_tile, 1, seq, hidden),
                           (b_tile, num_heads, seq, hidden)).reshape(g, seq, hidden)

    def bcast(w):  # (nh, a, b) -> (G, a, b), replicated over b_tile (tiny)
        return jnp.broadcast_to(w[None], (b_tile,) + w.shape
                                ).reshape((g,) + w.shape[1:])

    q = jnp.einsum('gsd,gde->gse', x_g, bcast(wq_ref[...]),
                   preferred_element_type=jnp.float32) + bcast(bq_ref[...])
    k = jnp.einsum('gsd,gde->gse', x_g, bcast(wk_ref[...]),
                   preferred_element_type=jnp.float32) + bcast(bk_ref[...])
    v = jnp.einsum('gsd,gde->gse', x_g, bcast(wv_ref[...]),
                   preferred_element_type=jnp.float32) + bcast(bv_ref[...])

    scale = 1.0 / math.sqrt(head_dim)
    s = jnp.einsum('gqd,gkd->gqk', q.astype(jnp.bfloat16), k.astype(jnp.bfloat16),
                   preferred_element_type=jnp.float32) * scale   # (G, S, S)

    # Additive key-padding mask computed in-kernel from the int32 ids.
    ids = ids_ref[...]                                        # (b_tile, 1, S)
    bias = jnp.where(ids != 0, 0.0, NEG_INF).astype(jnp.float32)
    bias = jnp.broadcast_to(bias[:, None], (b_tile, num_heads, 1, seq)
                            ).reshape(g, 1, seq)
    s = s + bias
    s = s - jnp.max(s, axis=-1, keepdims=True)
    p = jnp.exp(s)
    p = p * pl.reciprocal(jnp.sum(p, axis=-1, keepdims=True), approx=True)

    ctx = jnp.einsum('gqk,gkd->gqd', p.astype(jnp.bfloat16), v.astype(jnp.bfloat16),
                     preferred_element_type=jnp.float32)         # (G, S, hd)

    # Output projection per head (wo pre-permuted to (nh, hd, H) on the host),
    # then sum heads -> one lane-dense (M, H) slab written downstream.
    proj = jnp.einsum('gqd,gdo->gqo', ctx.astype(jnp.bfloat16), bcast(wo_ref[...]),
                      preferred_element_type=jnp.float32)        # (G, S, H)
    attn = proj.reshape(b_tile, num_heads, seq, hidden).sum(axis=1).reshape(m, hidden)
    attn = attn + bo_ref[...]

    x1 = _layernorm(attn + x, ln1_g_ref[...], ln1_b_ref[...], eps)

    # FFN (gelu) + residual + LayerNorm; matmuls see M = b_tile*S rows.
    # TODO(synk): HF bert uses exact erf-based GELU; tanh approximation here.
    h1 = jnp.dot(x1.astype(jnp.bfloat16), w1_ref[...],
                 preferred_element_type=jnp.float32) + b1_ref[...]
    h1 = jax.nn.gelu(h1)
    h2 = jnp.dot(h1.astype(jnp.bfloat16), w2_ref[...],
                 preferred_element_type=jnp.float32) + b2_ref[...]
    o_ref[...] = _layernorm(h2 + x1, ln2_g_ref[...], ln2_b_ref[...], eps)


# --------------------------------------------------------------------------
# Pallas wrappers
# --------------------------------------------------------------------------
def _full_spec(arr):
    shape = arr.shape
    return pl.BlockSpec(shape, lambda i: (0,) * len(shape))


def _choose_b_tile(b):
    """Fold batch rows per grid step to fatten matmul M, but keep >=2 grid
    steps when B >= 2 so both of v7x's TensorCores get work (v5e/v6e have one
    TC, where fewer, fatter steps would also be fine)."""
    if b < 2:
        return 1
    for bt in range(b // 2, 0, -1):
        if b % bt == 0:
            return bt
    return 1


def pallas_embedding(ids, word_emb, pos_emb, type_emb, gamma, beta, b, s, b_tile):
    """ids: (B, S) int32. Returns (B*S, H) f32 embeddings (post-LayerNorm)."""
    assert s <= pos_emb.shape[0], "sequence length exceeds position table"
    h = word_emb.shape[-1]
    m = b_tile * s
    assert b % b_tile == 0 and m % 8 == 0
    ids2d = ids.reshape(b * s, 1)
    pos_slice = pos_emb[:s]                  # host-side: rows for positions 0..S-1
    return pl.pallas_call(
        functools.partial(_embed_kernel, vocab=word_emb.shape[0],
                          b_tile=b_tile, seq=s, eps=LN_EPS),
        out_shape=jax.ShapeDtypeStruct((b * s, h), jnp.float32),
        grid=(b // b_tile,),
        in_specs=[
            pl.BlockSpec((m, 1), lambda i: (i, 0)),   # token ids for this block
            _full_spec(word_emb),
            _full_spec(pos_slice),
            _full_spec(type_emb),
            _full_spec(gamma),
            _full_spec(beta),
        ],
        out_specs=pl.BlockSpec((m, h), lambda i: (i, 0)),
        compiler_params=pltpu.CompilerParams(dimension_semantics=("parallel",)),
    )(ids2d, word_emb, pos_slice, type_emb, gamma, beta)


def pallas_encoder_layer(x, ids3d, layer, b, s, b_tile):
    """x: (B*S, H) f32; ids3d: (B, 1, S) int32.  One fused call per layer."""
    h = HIDDEN
    m = b_tile * s
    names = ["wq", "wk", "wv", "bq", "bk", "bv", "wo", "bo",
             "ln1_g", "ln1_b", "w1", "b1", "w2", "b2", "ln2_g", "ln2_b"]
    weights = [layer[n] for n in names]
    in_specs = ([pl.BlockSpec((m, h), lambda i: (i, 0)),          # activations
                 pl.BlockSpec((b_tile, 1, s), lambda i: (i, 0, 0))]  # ids (mask)
                + [_full_spec(w) for w in weights])               # resident weights
    return pl.pallas_call(
        functools.partial(_encoder_layer_kernel, b_tile=b_tile, seq=s,
                          num_heads=NUM_HEADS, head_dim=HEAD_DIM, eps=LN_EPS),
        out_shape=jax.ShapeDtypeStruct((b * s, h), jnp.float32),
        grid=(b // b_tile,),
        in_specs=in_specs,
        out_specs=pl.BlockSpec((m, h), lambda i: (i, 0)),
        compiler_params=pltpu.CompilerParams(dimension_semantics=("parallel",)),
    )(x, ids3d, *weights)


# --------------------------------------------------------------------------
# Parameter init (deterministic, synthetic) with host-side head pre-permute
# --------------------------------------------------------------------------
def init_params(key):
    def norm(k, shape, scale=0.02):
        return scale * jax.random.normal(k, shape, dtype=jnp.float32)

    def head_lead(w):  # (H, H) -> (nh, H, hd): heads moved to the leading axis
        return (w.reshape(HIDDEN, NUM_HEADS, HEAD_DIM)
                .transpose(1, 0, 2).astype(jnp.bfloat16))

    keys = iter(jax.random.split(key, 4 + NUM_LAYERS * 8))
    params = {
        "word_emb": norm(next(keys), (VOCAB, HIDDEN)).astype(jnp.bfloat16),
        "pos_emb": norm(next(keys), (MAX_POS, HIDDEN)),
        "type_emb": norm(next(keys), (1, HIDDEN)),
        "emb_ln_g": jnp.ones((1, HIDDEN), jnp.float32),
        "emb_ln_b": jnp.zeros((1, HIDDEN), jnp.float32),
        "layers": [],
    }
    for _ in range(NUM_LAYERS):
        wq = norm(next(keys), (HIDDEN, HIDDEN))
        wk = norm(next(keys), (HIDDEN, HIDDEN))
        wv = norm(next(keys), (HIDDEN, HIDDEN))
        wo = norm(next(keys), (HIDDEN, HIDDEN))
        w1 = norm(next(keys), (HIDDEN, FFN))
        w2 = norm(next(keys), (FFN, HIDDEN))
        layer = {
            # Host-side pre-permute (free, one-time for real checkpoints too):
            # q/k/v weights head-leading, wo grouped by (head, head_dim) rows.
            "wq": head_lead(wq), "wk": head_lead(wk), "wv": head_lead(wv),
            "bq": jnp.zeros((NUM_HEADS, 1, HEAD_DIM), jnp.float32),
            "bk": jnp.zeros((NUM_HEADS, 1, HEAD_DIM), jnp.float32),
            "bv": jnp.zeros((NUM_HEADS, 1, HEAD_DIM), jnp.float32),
            "wo": wo.reshape(NUM_HEADS, HEAD_DIM, HIDDEN).astype(jnp.bfloat16),
            "bo": jnp.zeros((1, HIDDEN), jnp.float32),
            "w1": w1.astype(jnp.bfloat16), "b1": jnp.zeros((1, FFN), jnp.float32),
            "w2": w2.astype(jnp.bfloat16), "b2": jnp.zeros((1, HIDDEN), jnp.float32),
            "ln1_g": jnp.ones((1, HIDDEN), jnp.float32),
            "ln1_b": jnp.zeros((1, HIDDEN), jnp.float32),
            "ln2_g": jnp.ones((1, HIDDEN), jnp.float32),
            "ln2_b": jnp.zeros((1, HIDDEN), jnp.float32),
        }
        for _ in range(2):   # burn unused keys to keep split count stable
            next(keys)
        params["layers"].append(layer)
    return params


# --------------------------------------------------------------------------
# LMAllEmbedding.forward: returns (lm_embedding(t_indexs), masks)
# --------------------------------------------------------------------------
def lm_all_embedding_forward(params, t_indexs):
    b, s = t_indexs.shape
    ids = t_indexs.astype(jnp.int32)
    b_tile = _choose_b_tile(b)

    # masks = Masking()(t_indexs, mask_val=0).  A dedicated pallas_call for a
    # (B,S) compare is pure launch overhead; plain jnp fuses in XLA.
    masks = ids != 0                                             # (B, S) bool

    # Embedding gather + LayerNorm, one fused kernel.
    x = pallas_embedding(ids, params["word_emb"], params["pos_emb"],
                         params["type_emb"], params["emb_ln_g"],
                         params["emb_ln_b"], b, s, b_tile)       # (B*S, H)

    # Key-padding mask is derived in-kernel from the int32 ids (no separate
    # f32 attention-bias array shipped from the host).
    ids3d = ids.reshape(b, 1, s)
    for layer in params["layers"]:
        x = pallas_encoder_layer(x, ids3d, layer, b, s, b_tile)

    hidden = x.reshape(b, s, HIDDEN)                             # BertModel(ids)[0]
    return hidden, masks


# --------------------------------------------------------------------------
if __name__ == "__main__":
    key = jax.random.PRNGKey(0)
    pkey, ikey = jax.random.split(key)
    params = init_params(pkey)

    B, S = 4, 8
    t_indexs = jax.random.randint(ikey, (B, S), 1, VOCAB, dtype=jnp.int32)
    t_indexs = t_indexs.at[1, 6:].set(0)   # 'post' padding in second sentence
    t_indexs = t_indexs.at[3, 5:].set(0)   # 'post' padding in fourth sentence

    hidden, masks = lm_all_embedding_forward(params, t_indexs)
    hidden = jax.block_until_ready(hidden)
    masks = jax.block_until_ready(masks)

    assert hidden.shape == (B, S, HIDDEN) and hidden.dtype == jnp.float32
    assert masks.shape == (B, S) and masks.dtype == jnp.bool_
    assert bool(jnp.all(jnp.isfinite(hidden)))
    assert bool(jnp.all(masks[0]))
    assert not bool(masks[1, 7]) and not bool(masks[3, 6])

    print("KERNEL_OK")
</pallas_src>

<mosaic_0001>
module attributes {stable_mosaic.version = 11 : i64} {
  func.func @_embed_kernel(%arg0: i32, %arg1: memref<16x1xi32, #tpu.memory_space<vmem>>, %arg2: memref<64x32xbf16, #tpu.memory_space<vmem>>, %arg3: memref<8x32xf32, #tpu.memory_space<vmem>>, %arg4: memref<1x32xf32, #tpu.memory_space<vmem>>, %arg5: memref<1x32xf32, #tpu.memory_space<vmem>>, %arg6: memref<1x32xf32, #tpu.memory_space<vmem>>, %arg7: memref<16x32xf32, #tpu.memory_space<vmem>>) attributes {dimension_semantics = [#tpu.dimension_semantics<parallel>], iteration_bounds = array<i64: 2>, scalar_prefetch = 0 : i64, scratch_operands = 0 : i64, tpu.core_type = #tpu.core_type<tc>, window_params = [{transform_indices = @transform_0, window_bounds = array<i64: 16, 1>}, {pipeline_mode = #tpu.pipeline_mode<synchronous>, transform_indices = @transform_1, window_bounds = array<i64: 64, 32>}, {pipeline_mode = #tpu.pipeline_mode<synchronous>, transform_indices = @transform_2, window_bounds = array<i64: 8, 32>}, {pipeline_mode = #tpu.pipeline_mode<synchronous>, transform_indices = @transform_3, window_bounds = array<i64: 1, 32>}, {pipeline_mode = #tpu.pipeline_mode<synchronous>, transform_indices = @transform_4, window_bounds = array<i64: 1, 32>}, {pipeline_mode = #tpu.pipeline_mode<synchronous>, transform_indices = @transform_5, window_bounds = array<i64: 1, 32>}, {transform_indices = @transform_6, window_bounds = array<i64: 16, 32>}]} {
    %c0 = arith.constant 0 : index
    %c0_0 = arith.constant 0 : index
    %0 = vector.load %arg1[%c0, %c0_0] : memref<16x1xi32, #tpu.memory_space<vmem>>, vector<16x1xi32>
    %1 = tpu.iota {dimensions = array<i32: 1>} : vector<16x64xi32>
    %2 = vector.broadcast %0 : vector<16x1xi32> to vector<16x64xi32>
    %3 = arith.cmpi eq, %1, %2 : vector<16x64xi32>
    %4 = arith.extui %3 : vector<16x64xi1> to vector<16x64xi32>
    %5 = arith.sitofp %4 : vector<16x64xi32> to vector<16x64xf32>
    %6 = arith.truncf %5 : vector<16x64xf32> to vector<16x64xbf16>
    %c0_1 = arith.constant 0 : index
    %c0_2 = arith.constant 0 : index
    %7 = vector.load %arg2[%c0_1, %c0_2] : memref<64x32xbf16, #tpu.memory_space<vmem>>, vector<64x32xbf16>
    %cst = arith.constant dense<0.000000e+00> : vector<16x32xf32>
    %8 = tpu.matmul %6, %7, %cst {dimension_numbers = #tpu.dot_dimension_numbers<[1], [0], [0], [1], [0, 0, 1, 1], [], []>} : vector<16x64xbf16>, vector<64x32xbf16>, vector<16x32xf32> -> vector<16x32xf32>
    %c0_3 = arith.constant 0 : index
    %c0_4 = arith.constant 0 : index
    %9 = vector.load %arg3[%c0_3, %c0_4] : memref<8x32xf32, #tpu.memory_space<vmem>>, vector<8x32xf32>
    %10 = vector.shape_cast %9 : vector<8x32xf32> to vector<1x8x32xf32>
    %11 = vector.shape_cast %10 : vector<1x8x32xf32> to vector<1x8x32xf32>
    %12 = vector.broadcast %11 : vector<1x8x32xf32> to vector<2x8x32xf32>
    %13 = vector.shape_cast %12 : vector<2x8x32xf32> to vector<16x32xf32>
    %14 = arith.addf %8, %13 : vector<16x32xf32>
    %c0_5 = arith.constant 0 : index
    %c0_6 = arith.constant 0 : index
    %15 = vector.load %arg4[%c0_5, %c0_6] : memref<1x32xf32, #tpu.memory_space<vmem>>, vector<1x32xf32>
    %16 = vector.broadcast %15 : vector<1x32xf32> to vector<16x32xf32>
    %17 = arith.addf %14, %16 : vector<16x32xf32>
    %c0_7 = arith.constant 0 : index
    %c0_8 = arith.constant 0 : index
    %18 = vector.load %arg5[%c0_7, %c0_8] : memref<1x32xf32, #tpu.memory_space<vmem>>, vector<1x32xf32>
    %c0_9 = arith.constant 0 : index
    %c0_10 = arith.constant 0 : index
    %19 = vector.load %arg6[%c0_9, %c0_10] : memref<1x32xf32, #tpu.memory_space<vmem>>, vector<1x32xf32>
    %cst_11 = arith.constant dense<0.000000e+00> : vector<16xf32>
    %20 = vector.multi_reduction <add>, %17, %cst_11 [1] : vector<16x32xf32> to vector<16xf32>
    %21 = vector.shape_cast %20 : vector<16xf32> to vector<16x1xf32>
    %cst_12 = arith.constant 3.200000e+01 : f32
    %22 = vector.broadcast %cst_12 : f32 to vector<16x1xf32>
    %23 = arith.divf %21, %22 : vector<16x1xf32>
    %24 = vector.broadcast %23 : vector<16x1xf32> to vector<16x32xf32>
    %25 = arith.subf %17, %24 : vector<16x32xf32>
    %26 = arith.mulf %25, %25 : vector<16x32xf32>
    %cst_13 = arith.constant dense<0.000000e+00> : vector<16xf32>
    %27 = vector.multi_reduction <add>, %26, %cst_13 [1] : vector<16x32xf32> to vector<16xf32>
    %28 = vector.shape_cast %27 : vector<16xf32> to vector<16x1xf32>
    %cst_14 = arith.constant 3.200000e+01 : f32
    %29 = vector.broadcast %cst_14 : f32 to vector<16x1xf32>
    %30 = arith.divf %28, %29 : vector<16x1xf32>
    %31 = vector.broadcast %23 : vector<16x1xf32> to vector<16x32xf32>
    %32 = arith.subf %17, %31 : vector<16x32xf32>
    %cst_15 = arith.constant 9.99999996E-13 : f32
    %33 = vector.broadcast %cst_15 : f32 to vector<16x1xf32>
    %34 = arith.addf %30, %33 : vector<16x1xf32>
    %35 = math.rsqrt %34 : vector<16x1xf32>
    %36 = vector.broadcast %35 : vector<16x1xf32> to vector<16x32xf32>
    %37 = arith.mulf %32, %36 : vector<16x32xf32>
    %38 = vector.broadcast %18 : vector<1x32xf32> to vector<16x32xf32>
    %39 = arith.mulf %37, %38 : vector<16x32xf32>
    %40 = vector.broadcast %19 : vector<1x32xf32> to vector<16x32xf32>
    %41 = arith.addf %39, %40 : vector<16x32xf32>
    %c0_16 = arith.constant 0 : index
    %c0_17 = arith.constant 0 : index
    %42 = vector.load %arg7[%c0_16, %c0_17] : memref<16x32xf32, #tpu.memory_space<vmem>>, vector<16x32xf32>
    tpu.vector_store %arg7[%c0_16, %c0_17], %41 {strides = array<i32>} : memref<16x32xf32, #tpu.memory_space<vmem>>, vector<16x32xf32>,
    return
  }
  func.func @transform_0(%arg0: i32) -> (i32, i32) {
    %c0_i32 = arith.constant 0 : i32
    %c0_i32_0 = arith.constant 0 : i32
    return %arg0, %c0_i32 : i32, i32
  }
  func.func @transform_1(%arg0: i32) -> (i32, i32) {
    %c0_i32 = arith.constant 0 : i32
    %c0_i32_0 = arith.constant 0 : i32
    %c0_i32_1 = arith.constant 0 : i32
    return %c0_i32, %c0_i32_0 : i32, i32
  }
  func.func @transform_2(%arg0: i32) -> (i32, i32) {
    %c0_i32 = arith.constant 0 : i32
    %c0_i32_0 = arith.constant 0 : i32
    %c0_i32_1 = arith.constant 0 : i32
    return %c0_i32, %c0_i32_0 : i32, i32
  }
  func.func @transform_3(%arg0: i32) -> (i32, i32) {
    %c0_i32 = arith.constant 0 : i32
    %c0_i32_0 = arith.constant 0 : i32
    %c0_i32_1 = arith.constant 0 : i32
    return %c0_i32, %c0_i32_0 : i32, i32
  }
  func.func @transform_4(%arg0: i32) -> (i32, i32) {
    %c0_i32 = arith.constant 0 : i32
    %c0_i32_0 = arith.constant 0 : i32
    %c0_i32_1 = arith.constant 0 : i32
    return %c0_i32, %c0_i32_0 : i32, i32
  }
  func.func @transform_5(%arg0: i32) -> (i32, i32) {
    %c0_i32 = arith.constant 0 : i32
    %c0_i32_0 = arith.constant 0 : i32
    %c0_i32_1 = arith.constant 0 : i32
    return %c0_i32, %c0_i32_0 : i32, i32
  }
  func.func @transform_6(%arg0: i32) -> (i32, i32) {
    %c0_i32 = arith.constant 0 : i32
    %c0_i32_0 = arith.constant 0 : i32
    return %arg0, %c0_i32 : i32, i32
  }
}

</mosaic_0001>

<llo_original>
// kernel: tpu_custom_call.1
$region0: #{tpu_custom_call.1}
  #allocation0 [shape = 'u32[]', space=smem, size = 0x4, offset = 0x4, fixed_abs, tag = 'smem constant byte address 0x4 - core index']
  #allocation1 [shape = 'u32[144,128]{1,0:T(1,128)}', space=vmem, size = 0x12000, scoped, tag = 'internal scratch']
  %s0 = inlined_call_operand.vmem [shape: s32[32,1], index: 0, kind: input, shape index: {}]
  %s1 = inlined_call_operand.vmem [shape: bf16[64,32], index: 1, kind: input, shape index: {}]
  %s2 = inlined_call_operand.vmem [shape: f32[8,32], index: 2, kind: input, shape index: {}]
  %s3 = inlined_call_operand.vmem [shape: f32[1,32], index: 3, kind: input, shape index: {}]
  %s4 = inlined_call_operand.vmem [shape: f32[1,32], index: 4, kind: input, shape index: {}]
  %s5 = inlined_call_operand.vmem [shape: f32[1,32], index: 5, kind: input, shape index: {}]
  %s6 = inlined_call_operand.hbm [shape: f32[32,32], index: 6, kind: output, shape index: {}]
  %s7 = sld [smem:[#allocation0]]
  $region57: #{tpu_custom_call.1} parent=0
    _
  %s9 = ssub.s32 1, %s7
  %s10 = scalar_select 0, %s9, %s7
  $region1: #{tpu_custom_call.1} parent=0
    #allocation2 [shape = 'u8[16384]{0}', space=vmem, size = 0x4000, scoped, tag = 'output window, operand 0']
    #allocation3 [shape = 's32[2]{0}', space=sflag, size = 0x8, scoped, tag = 'scoped memory for tpu_custom_call.1']
    %11 = vsyncpa [#allocation3], 0
    %s12 = scalar_lea.sflag [#allocation3], 1
    %13 = vsyncpa %s12, 0
    loop: start=0, step=1, limit=4
    $region2: #{tpu_custom_call.1} parent=1 // loop_pre_header
      _
    $region3: #{tpu_custom_call.1} parent=1 // loop_header
      %s15 = sphi 0, %s19
      %p16 = scmp.ge.s32.totalorder %s15, 4
      %s25 = sphi 0, %s27
      %s28 = sphi 0, %s25
      %s29 = sphi 0, %s28
      %s45 = sphi 0, %s29
      %s49 = sphi 0, %s49
      %s51 = sphi 0, %s49
      %s52 = sphi 0, %s51
      %s66 = sphi 0, %s52
      %s70 = sphi 0, %s70
      %s72 = sphi 0, %s70
      %s73 = sphi 0, %s72
      %s87 = sphi 0, %s73
      %s91 = sphi 0, %s91
      %s93 = sphi 0, %s91
      %s94 = sphi 0, %s93
      %s108 = sphi 0, %s94
      %s112 = sphi 0, %s112
      %s114 = sphi 0, %s112
      %s115 = sphi 0, %s114
      %s129 = sphi 0, %s115
      %s133 = sphi 0, %s133
      %s135 = sphi 0, %s133
      %s136 = sphi 0, %s135
      %s150 = sphi 0, %s136
      %s156 = sphi 0, %s158
      %s159 = sphi 0, %s156
      %s160 = sphi 0, %s159
      %s176 = sphi 0, %s160
    $region4: #{tpu_custom_call.1} parent=1 // loop_header_branch
      %18 = sbr.rel (%p16) target = $region8
    $region5: #{tpu_custom_call.1} parent=1 // loop_body
      %s20 = ssub.s32 %s15, 1
      %s21 = ssub.s32 %s15, 2
      %s22 = sadd.s32 %s15, 1
      %s23 = ssub.s32 %s15, %s22
      %p24 = scmp.eq.s32.totalorder %s23, 0
      %s26 = sadd.s32 %s25, 1
      %s27 = scalar_select %p24, %s25, %s26
      %p30 = pneg %p24
      %p31 = scmp.eq.s32.totalorder %s15, 1
      %p32 = por %p30, %p31
      %p33 = scmp.ne.s32.totalorder %s25, %s28
      %p34 = scmp.eq.s32.totalorder %s15, 0
      %p35 = por %p33, %p34
      %p36 = scmp.ne.s32.totalorder %s25, %s28
      %p37 = scmp.eq.s32.totalorder %s20, 1
      %p38 = por %p36, %p37
      %p39 = scmp.ne.s32.totalorder %s28, %s29
      %p40 = scmp.eq.s32.totalorder %s20, 0
      %p41 = por %p39, %p40
      %p42 = scmp.ne.s32.totalorder %s28, %s29
      %p43 = scmp.eq.s32.totalorder %s21, 1
      %p44 = por %p42, %p43
      %p46 = scmp.ne.s32.totalorder %s29, %s45
      %p47 = scmp.eq.s32.totalorder %s21, 0
      %p48 = por %p46, %p47
      %s50 = sadd.s32 %s49, 1
      %p53 = scmp.eq.s32.totalorder %s15, 1
      %p54 = scmp.ne.s32.totalorder %s49, %s51
      %p55 = scmp.eq.s32.totalorder %s15, 0
      %p56 = por %p54, %p55
      %p57 = scmp.ne.s32.totalorder %s49, %s51
      %p58 = scmp.eq.s32.totalorder %s20, 1
      %p59 = por %p57, %p58
      %p60 = scmp.ne.s32.totalorder %s51, %s52
      %p61 = scmp.eq.s32.totalorder %s20, 0
      %p62 = por %p60, %p61
      %p63 = scmp.ne.s32.totalorder %s51, %s52
      %p64 = scmp.eq.s32.totalorder %s21, 1
      %p65 = por %p63, %p64
      %p67 = scmp.ne.s32.totalorder %s52, %s66
      %p68 = scmp.eq.s32.totalorder %s21, 0
      %p69 = por %p67, %p68
      %s71 = sadd.s32 %s70, 1
      %p74 = scmp.eq.s32.totalorder %s15, 1
      %p75 = scmp.ne.s32.totalorder %s70, %s72
      %p76 = scmp.eq.s32.totalorder %s15, 0
      %p77 = por %p75, %p76
      %p78 = scmp.ne.s32.totalorder %s70, %s72
      %p79 = scmp.eq.s32.totalorder %s20, 1
      %p80 = por %p78, %p79
      %p81 = scmp.ne.s32.totalorder %s72, %s73
      %p82 = scmp.eq.s32.totalorder %s20, 0
      %p83 = por %p81, %p82
      %p84 = scmp.ne.s32.totalorder %s72, %s73
      %p85 = scmp.eq.s32.totalorder %s21, 1
      %p86 = por %p84, %p85
      %p88 = scmp.ne.s32.totalorder %s73, %s87
      %p89 = scmp.eq.s32.totalorder %s21, 0
      %p90 = por %p88, %p89
      %s92 = sadd.s32 %s91, 1
      %p95 = scmp.eq.s32.totalorder %s15, 1
      %p96 = scmp.ne.s32.totalorder %s91, %s93
      %p97 = scmp.eq.s32.totalorder %s15, 0
      %p98 = por %p96, %p97
      %p99 = scmp.ne.s32.totalorder %s91, %s93
      %p100 = scmp.eq.s32.totalorder %s20, 1
      %p101 = por %p99, %p100
      %p102 = scmp.ne.s32.totalorder %s93, %s94
      %p103 = scmp.eq.s32.totalorder %s20, 0
      %p104 = por %p102, %p103
      %p105 = scmp.ne.s32.totalorder %s93, %s94
      %p106 = scmp.eq.s32.totalorder %s21, 1
      %p107 = por %p105, %p106
      %p109 = scmp.ne.s32.totalorder %s94, %s108
      %p110 = scmp.eq.s32.totalorder %s21, 0
      %p111 = por %p109, %p110
      %s113 = sadd.s32 %s112, 1
      %p116 = scmp.eq.s32.totalorder %s15, 1
      %p117 = scmp.ne.s32.totalorder %s112, %s114
      %p118 = scmp.eq.s32.totalorder %s15, 0
      %p119 = por %p117, %p118
      %p120 = scmp.ne.s32.totalorder %s112, %s114
      %p121 = scmp.eq.s32.totalorder %s20, 1
      %p122 = por %p120, %p121
      %p123 = scmp.ne.s32.totalorder %s114, %s115
      %p124 = scmp.eq.s32.totalorder %s20, 0
      %p125 = por %p123, %p124
      %p126 = scmp.ne.s32.totalorder %s114, %s115
      %p127 = scmp.eq.s32.totalorder %s21, 1
      %p128 = por %p126, %p127
      %p130 = scmp.ne.s32.totalorder %s115, %s129
      %p131 = scmp.eq.s32.totalorder %s21, 0
      %p132 = por %p130, %p131
      %s134 = sadd.s32 %s133, 1
      %p137 = scmp.eq.s32.totalorder %s15, 1
      %p138 = scmp.ne.s32.totalorder %s133, %s135
      %p139 = scmp.eq.s32.totalorder %s15, 0
      %p140 = por %p138, %p139
      %p141 = scmp.ne.s32.totalorder %s133, %s135
      %p142 = scmp.eq.s32.totalorder %s20, 1
      %p143 = por %p141, %p142
      %p144 = scmp.ne.s32.totalorder %s135, %s136
      %p145 = scmp.eq.s32.totalorder %s20, 0
      %p146 = por %p144, %p145
      %p147 = scmp.ne.s32.totalorder %s135, %s136
      %p148 = scmp.eq.s32.totalorder %s21, 1
      %p149 = por %p147, %p148
      %p151 = scmp.ne.s32.totalorder %s136, %s150
      %p152 = scmp.eq.s32.totalorder %s21, 0
      %p153 = por %p151, %p152
      %s154 = ssub.s32 %s15, %s22
      %p155 = scmp.eq.s32.totalorder %s154, 0
      %s157 = sadd.s32 %s156, 1
      %s158 = scalar_select %p155, %s156, %s157
      %p161 = pneg %p155
      %p162 = scmp.eq.s32.totalorder %s15, 1
      %p163 = por %p161, %p162
      %p164 = scmp.ne.s32.totalorder %s156, %s159
      %p165 = scmp.eq.s32.totalorder %s15, 0
      %p166 = por %p164, %p165
      %p167 = scmp.ne.s32.totalorder %s156, %s159
      %p168 = scmp.eq.s32.totalorder %s20, 1
      %p169 = por %p167, %p168
      %p170 = scmp.ne.s32.totalorder %s159, %s160
      %p171 = scmp.eq.s32.totalorder %s20, 0
      %p172 = por %p170, %p171
      %p173 = scmp.ne.s32.totalorder %s159, %s160
      %p174 = scmp.eq.s32.totalorder %s21, 1
      %p175 = por %p173, %p174
      %p177 = scmp.ne.s32.totalorder %s160, %s176
      %p178 = scmp.eq.s32.totalorder %s21, 0
      %p179 = por %p177, %p178
      %p180 = scmp.le.s32.totalorder 1, %s15
      %p181 = scmp.lt.s32.totalorder %s15, 3
      %p182 = pnand %p180, %p181
      %p183 = pneg %p182
      // Predicated region
      $region9: #{tpu_custom_call.1} parent=5 // pred_check
        _
      $region10: #{tpu_custom_call.1} parent=5 // pred_check_branch
        %185 = sbr.rel (%p182) target = $region12
      $region11: #{tpu_custom_call.1} parent=5 // pred_region
        %s186 = ssub.s32 %s15, 1
        // Predicated region
        $region13: #{tpu_custom_call.1} parent=11 // pred_check
          %p187 = pneg %p62
        $region14: #{tpu_custom_call.1} parent=11 // pred_check_branch
          %189 = sbr.rel (%p187) target = $region16
        $region15: #{tpu_custom_call.1} parent=11 // pred_region
          _
        $region16: #{tpu_custom_call.1} parent=11 // pred_fallthru
          _
        // Predicated region
        $region17: #{tpu_custom_call.1} parent=11 // pred_check
          %p190 = pneg %p83
        $region18: #{tpu_custom_call.1} parent=11 // pred_check_branch
          %192 = sbr.rel (%p190) target = $region20
        $region19: #{tpu_custom_call.1} parent=11 // pred_region
          _
        $region20: #{tpu_custom_call.1} parent=11 // pred_fallthru
          _
        // Predicated region
        $region21: #{tpu_custom_call.1} parent=11 // pred_check
          %p193 = pneg %p104
        $region22: #{tpu_custom_call.1} parent=11 // pred_check_branch
          %195 = sbr.rel (%p193) target = $region24
        $region23: #{tpu_custom_call.1} parent=11 // pred_region
          _
        $region24: #{tpu_custom_call.1} parent=11 // pred_fallthru
          _
        // Predicated region
        $region25: #{tpu_custom_call.1} parent=11 // pred_check
          %p196 = pneg %p125
        $region26: #{tpu_custom_call.1} parent=11 // pred_check_branch
          %198 = sbr.rel (%p196) target = $region28
        $region27: #{tpu_custom_call.1} parent=11 // pred_region
          _
        $region28: #{tpu_custom_call.1} parent=11 // pred_fallthru
          _
        // Predicated region
        $region29: #{tpu_custom_call.1} parent=11 // pred_check
          %p199 = pneg %p146
        $region30: #{tpu_custom_call.1} parent=11 // pred_check_branch
          %201 = sbr.rel (%p199) target = $region32
        $region31: #{tpu_custom_call.1} parent=11 // pred_region
          _
        $region32: #{tpu_custom_call.1} parent=11 // pred_fallthru
          _
      $region12: #{tpu_custom_call.1} parent=5 // pred_fallthru
        _
      %p202 = scmp.lt.s32.totalorder %s15, 2
      // Predicated region
      $region33: #{tpu_custom_call.1} parent=5 // pred_check
        %p203 = pneg %p202
      $region34: #{tpu_custom_call.1} parent=5 // pred_check_branch
        %205 = sbr.rel (%p203) target = $region36
      $region35: #{tpu_custom_call.1} parent=5 // pred_region
        // Predicated region
        $region37: #{tpu_custom_call.1} parent=35 // pred_check
          %p206 = pneg %p35
        $region38: #{tpu_custom_call.1} parent=35 // pred_check_branch
          %208 = sbr.rel (%p206) target = $region40
        $region39: #{tpu_custom_call.1} parent=35 // pred_region
          %s209 = smul.u32 2, %s15
          %p210 = scmp.lt.s32.totalorder %s209, 3
          %s211 = scalar_select %p210, %s209, 3
          %s212 = smul.addr %s211, 8
          %s213 = scalar_lea.vmem %s0, %s212
          %s214 = smul.u32 2, %s15
        $region40: #{tpu_custom_call.1} parent=35 // pred_fallthru
          _
      $region36: #{tpu_custom_call.1} parent=5 // pred_fallthru
        _
      %p215 = scmp.le.s32.totalorder 1, %s15
      %p216 = scmp.lt.s32.totalorder %s15, 3
      %p217 = pnand %p215, %p216
      %p218 = pneg %p217
      // Predicated region
      $region41: #{tpu_custom_call.1} parent=5 // pred_check
        _
      $region42: #{tpu_custom_call.1} parent=5 // pred_check_branch
        %220 = sbr.rel (%p217) target = $region44
      $region43: #{tpu_custom_call.1} parent=5 // pred_region
        %s221 = ssub.s32 %s15, 1
        %s222 = smul.u32 2, %s20
        %p223 = scmp.lt.s32.totalorder %s222, 3
        %s224 = scalar_select %p223, %s222, 3
        %s225 = smul.addr %s224, 8
        %s226 = scalar_lea.vmem %s0, %s225
        %p227 = pneg %p41
        %p228 = pneg %p38
        %p229 = pneg %p62
        %p230 = pneg %p59
        %p231 = pneg %p83
        %p232 = pneg %p80
        %p233 = pneg %p104
        %p234 = pneg %p101
        %p235 = pneg %p125
        %p236 = pneg %p122
        %p237 = pneg %p146
        %p238 = pneg %p143
        %p239 = pneg %p172
        %p240 = pneg %p169
        %s241 = sand.u32 %s159, 1
        %s242 = scalar_lea.sflag [#allocation3], %s241
        %s243 = sand.u32 %s159, 1
        %s244 = smul.addr %s243, 16
        %s245 = scalar_lea.vmem [#allocation2], %s244
        %s246 = smul.u32 2, %s20
        %p247 = scmp.lt.s32.totalorder %s246, 3
        %s248 = scalar_select %p247, %s246, 3
        %s249 = smul.addr %s248, 8
        %s250 = scalar_lea.vmem %s0, %s249
        %s251 = smul.u32 2, %s20
        %s252 = smul.u32 2, %s20
        %v254 = vld [vmem:[%s250] sm:$0xff]
        %v255 = vld [vmem:[%s250 + $0x8] sm:$0xff]
        %v256 = vlaneseq
        %v257 = vand.u32 %v256, 127
        %258 = vset.pattern.permute.xlu0 0
        %259 = vperm.xlu0 %258, %v254
        %v260 = vpop.permute.xlu0 %259
        %261 = vset.pattern.permute.xlu0 0
        %262 = vperm.xlu0 %261, %v255
        %v263 = vpop.permute.xlu0 %262
        %vm264 = vcmp.eq.s32.totalorder %v257, %v260
        %vm265 = vcmp.eq.s32.totalorder %v257, %v263
        %v266 = vsel %vm264, 1, 0
        %v267 = vsel %vm265, 1, 0
        %v268 = vcvt.s32.f32 %v266
        %v269 = vcvt.s32.f32 %v267
        %v270 = vpack.c.bf16 %v269, %v268
        %v271 = vld [vmem:[%s1] sm:$0xf]
        %v272 = vld [vmem:[%s1 + $0x4] sm:$0xf]
        %v273 = vld [vmem:[%s1 + $0x8] sm:$0xf]
        %v274 = vld [vmem:[%s1 + $0xc] sm:$0xf]
        %v275 = vld [vmem:[%s1 + $0x10] sm:$0xf]
        %v276 = vld [vmem:[%s1 + $0x14] sm:$0xf]
        %v277 = vld [vmem:[%s1 + $0x18] sm:$0xf]
        %v278 = vld [vmem:[%s1 + $0x1c] sm:$0xf]
        %v279 = vld [vmem:[%s2] sm:$0xff]
        %v288 = vunpack.c.l.b16 %v271
        %v289 = vunpack.c.l.b16 %v272
        %v290 = vunpack.c.l.b16 %v273
        %v291 = vunpack.c.l.b16 %v274
        %v292 = vunpack.c.l.b16 %v275
        %v293 = vunpack.c.l.b16 %v276
        %v294 = vunpack.c.l.b16 %v277
        %v295 = vunpack.c.l.b16 %v278
        %v296 = vpack.c.b16 %v289, %v288
        %v297 = vpack.c.b16 %v291, %v290
        %v298 = vpack.c.b16 %v293, %v292
        %v299 = vpack.c.b16 %v295, %v294
        %vm304 = vcmask 523264
        %v306 = vsel %vm304, %v270, 0
        %308 = vmatprep.subr.bf16.mxu0 0
        %309 = vmatpush1.bf16.msra.mxu0 0
        %310 = vmatprep.subr.bf16.mxu0 0
        %311 = vmatpush1.bf16.msra.mxu0 0
        %312 = vmatprep.subr.bf16.mxu0 0
        %313 = vmatpush1.bf16.msra.mxu0 0
        %314 = vmatprep.subr.bf16.mxu0 0
        %315 = vmatpush1.bf16.msra.mxu0 0
        %316 = vmatprep.subr.bf16.mxu0 0
        %317 = vmatpush1.bf16.msra.mxu0 %v299
        %318 = vmatprep.subr.bf16.mxu0 0
        %319 = vmatpush1.bf16.msra.mxu0 %v298
        %320 = vmatprep.subr.bf16.mxu0 0
        %321 = vmatpush1.bf16.msra.mxu0 %v297
        %322 = vmatprep.subr.bf16.mxu0 0
        %323 = vmatpush1.bf16.msra.mxu0 %v296
        %324 = vmatprep.subr.bf16.mxu0 0
        %325 = vmatpush2.bf16.msra.mxu0 0
        %326 = vmatprep.subr.bf16.mxu0 0
        %327 = vmatpush2.bf16.msra.mxu0 0
        %328 = vmatprep.subr.bf16.mxu0 0
        %329 = vmatpush2.bf16.msra.mxu0 0
        %330 = vmatprep.subr.bf16.mxu0 0
        %331 = vmatpush2.bf16.msra.mxu0 0
        %332 = vmatprep.subr.bf16.mxu0 0
        %333 = vmatpush2.bf16.msra.mxu0 0
        %334 = vmatprep.subr.bf16.mxu0 0
        %335 = vmatpush2.bf16.msra.mxu0 0
        %336 = vmatprep.subr.bf16.mxu0 0
        %337 = vmatpush2.bf16.msra.mxu0 0
        %338 = vmatprep.subr.bf16.mxu0 0
        %339 = vmatpush2.bf16.msra.mxu0 0
        %340 = vmatprep.mubr.bf16.mxu0 0
        %341 = vmatmul.mubr.bf16.gmra.mxu0 %v306
        %v342 = vpop.f32.mrf.mxu0
        %v343 = vadd.f32 %v279, %v342
        %v344 = vpop.f32.mrf.mxu0
        %v345 = vpop.f32.mrf.mxu0
        %v346 = vadd.f32 %v279, %v345
        %v347 = vpop.f32.mrf.mxu0
        %348 = vdwg.mxu0
        %v349 = vld [vmem:[%s3] sm:$0x1]
        %v351 = vlaneseq
        %v352 = vshrl.u32 %v351, 7
        %v353 = vsub.s32 0, %v352
        %v354 = vrot.slane %v349, %v353
        %v356 = vadd.f32 %v343, %v354
        %v357 = vadd.f32 %v346, %v354
        %v358 = vld [vmem:[%s4] sm:$0x1]
        %v359 = vld [vmem:[%s5] sm:$0x1]
        %vm360 = vcmask 261120
        %v361 = vsel %vm360, %v356, 0.0
        %362 = vadd.xlane.f32.xlu0 %v361
        %v363 = vpop.xlane.xlu0 %362
        %v364 = vsel %vm360, %v357, 0.0
        %365 = vadd.xlane.f32.xlu0 %v364
        %v366 = vpop.xlane.xlu0 %365
        %v367 = vrcp.pop 32.0
        %v368 = vmul.f32 %v363, %v367
        %v369 = vmul.f32 %v366, %v367
        %v370 = vsub.f32 %v356, %v368
        %v371 = vsub.f32 %v357, %v369
        %v372 = vmul.f32 %v370, %v370
        %v373 = vmul.f32 %v371, %v371
        %v374 = vsel %vm360, %v372, 0.0
        %375 = vadd.xlane.f32.xlu0 %v374
        %v376 = vpop.xlane.xlu0 %375
        %v377 = vsel %vm360, %v373, 0.0
        %378 = vadd.xlane.f32.xlu0 %v377
        %v379 = vpop.xlane.xlu0 %378
        %v380 = vmul.f32 %v376, %v367
        %v381 = vmul.f32 %v379, %v367
        %v382 = vadd.f32 %v380, 1e-12
        %v383 = vadd.f32 %v381, 1e-12
        %v384 = vrsqrt.pop %v382
        %v385 = vrsqrt.pop %v383
        %v386 = vmul.f32 %v370, %v384
        %v387 = vmul.f32 %v371, %v385
        %v389 = vlaneseq
        %v390 = vshrl.u32 %v389, 7
        %v391 = vsub.s32 0, %v390
        %v392 = vrot.slane %v358, %v391
        %v394 = vmul.f32 %v386, %v392
        %v395 = vmul.f32 %v387, %v392
        %v397 = vlaneseq
        %v398 = vshrl.u32 %v397, 7
        %v399 = vsub.s32 0, %v398
        %v400 = vrot.slane %v359, %v399
        %v402 = vadd.f32 %v394, %v400
        %v403 = vadd.f32 %v395, %v400
        %404 = vst.msk [vmem:[%s245] sm:$0xff] %vm360, %v402
        %405 = vst.msk [vmem:[%s245 + $0x8] sm:$0xff] %vm360, %v403
        %s406 = sand.u32 %s159, 1
        %s407 = scalar_lea.sflag [#allocation3], %s406
        %s408 = sand.u32 %s159, 1
        %s409 = smul.addr %s408, 16
        %s410 = scalar_lea.vmem [#allocation2], %s409
        // Predicated region
        $region45: #{tpu_custom_call.1} parent=43 // pred_check
          %p411 = pneg %p169
        $region46: #{tpu_custom_call.1} parent=43 // pred_check_branch
          %413 = sbr.rel (%p411) target = $region48
        $region47: #{tpu_custom_call.1} parent=43 // pred_region
          %s414 = smul.u32 2, %s20
          %s416 = ssub.s32 256, 256
          %417 = vsyncadd %s407, %s416
          %s418 = smul.addr %s414, 128
          %s419 = scalar_lea.hbm %s6, %s418
          %s420 = sshll.u32 %s410, 4
          %s421 = int_to_ptr.vmem [resolvable:$true] %s420
          %426 = dma.vmem_to_hbm [thread:$0]  %s421, 256, %s419, %s407, 128, 128, 8
        $region48: #{tpu_custom_call.1} parent=43 // pred_fallthru
          _
      $region44: #{tpu_custom_call.1} parent=5 // pred_fallthru
        _
      %p427 = scmp.le.s32.totalorder 2, %s15
      // Predicated region
      $region49: #{tpu_custom_call.1} parent=5 // pred_check
        %p428 = pneg %p427
      $region50: #{tpu_custom_call.1} parent=5 // pred_check_branch
        %430 = sbr.rel (%p428) target = $region52
      $region51: #{tpu_custom_call.1} parent=5 // pred_region
        %s431 = ssub.s32 %s15, 2
        // Predicated region
        $region53: #{tpu_custom_call.1} parent=51 // pred_check
          %p432 = pneg %p175
        $region54: #{tpu_custom_call.1} parent=51 // pred_check_branch
          %434 = sbr.rel (%p432) target = $region56
        $region55: #{tpu_custom_call.1} parent=51 // pred_region
          %s435 = sand.u32 %s160, 1
          %s436 = scalar_lea.sflag [#allocation3], %s435
          %s437 = sand.u32 %s160, 1
          %s438 = smul.addr %s437, 16
          %s439 = scalar_lea.vmem [#allocation2], %s438
          %440 = dma.done %s436, 256
        $region56: #{tpu_custom_call.1} parent=51 // pred_fallthru
          _
      $region52: #{tpu_custom_call.1} parent=5 // pred_fallthru
        _
    $region6: #{tpu_custom_call.1} parent=1 // loop_footer
      %s19 = sadd.s32 1, %s15
    $region7: #{tpu_custom_call.1} parent=1 // loop_footer_branch
      %14 = sbr.rel target = $region3
    $region8: #{tpu_custom_call.1} parent=1 // loop_exit
      _
    %441 = vsyncpa [#allocation3], 1
    %s442 = scalar_lea.sflag [#allocation3], 1
    %443 = vsyncpa %s442, 1

</llo_original>
